<compile_context>
chip_gen: v7x
topology: tpu7x:2x2x1
jax: 0.10.0
libtpu: 0.0.40
codegen_flags: <defaults>
</compile_context>

<pallas_src>
import jax
import jax.numpy as jnp
from jax.experimental import pallas as pl
from jax.experimental.pallas import tpu as pltpu

NUM_STATE = 2      # env.observation_space.shape[0] for MountainCar-v0
NUM_ACTION = 3     # env.action_space.n for MountainCar-v0
HIDDEN = 100

H_PAD = 128        # HIDDEN padded to full lane width (MXU K dim)
OUT_PAD = 128      # fc2 MXU output width (full lane width for clean vmatmul)
OUT_STORE = 8      # lanes actually written back to HBM (>= NUM_ACTION)
DEFAULT_TILE_B = 4096   # fits default scoped VMEM on v5e/v6e/v7x


def _cdiv(a, b):
    return (a + b - 1) // b


def _round_up(x, m):
    return ((x + m - 1) // m) * m


def _net_kernel(x_ref, w1t_ref, b1_ref, w2t_ref, b2_ref, out_ref):
    # x:    [TILE_B, NUM_STATE]            fp32
    # w1t:  [NUM_STATE, H_PAD]             fp32 (zero-padded cols 100:128)
    # b1:   [1, H_PAD]                     fp32 (zero-padded)
    # w2t:  [H_PAD, OUT_PAD]               bf16 (zero-padded rows/cols)
    # b2:   [1, OUT_STORE]                 fp32 (zero-padded cols 3:8)
    # out:  [TILE_B, OUT_STORE]            fp32
    x = x_ref[...]
    w1t = w1t_ref[...]

    # fc1 as VPU FMAs (contraction depth is only 2 -> MXU would be ~idle).
    h = (x[:, 0:1] * w1t[0:1, :]
         + x[:, 1:2] * w1t[1:2, :]
         + b1_ref[...])
    h = jnp.maximum(h, 0.0)  # F.relu; padded lanes stay exactly 0

    # fc2 on the MXU: bf16 operands, fp32 accumulation.
    out = jnp.dot(h.astype(jnp.bfloat16), w2t_ref[...],
                  preferred_element_type=jnp.float32)

    # Narrow store: only the first OUT_STORE lanes hit HBM (masked vst).
    out_ref[...] = (out[:, :OUT_STORE] + b2_ref[...]).astype(out_ref.dtype)


def prepare_params(w1, b1, w2, b2):
    """One-time (per parameter update) transpose + zero-pad to lane-dense layout.

    w1: [HIDDEN, NUM_STATE]  b1: [HIDDEN]       (PyTorch Linear layout)
    w2: [NUM_ACTION, HIDDEN] b2: [NUM_ACTION]
    """
    w1t_p = jnp.zeros((NUM_STATE, H_PAD), jnp.float32)
    w1t_p = w1t_p.at[:, :HIDDEN].set(jnp.asarray(w1, jnp.float32).T)

    b1_p = jnp.zeros((1, H_PAD), jnp.float32)
    b1_p = b1_p.at[0, :HIDDEN].set(jnp.asarray(b1, jnp.float32))

    # fc2 weights stored in bf16 (MXU-native on v5e/v6e/v7x).
    w2t_p = jnp.zeros((H_PAD, OUT_PAD), jnp.float32)
    w2t_p = w2t_p.at[:HIDDEN, :NUM_ACTION].set(jnp.asarray(w2, jnp.float32).T)
    w2t_p = w2t_p.astype(jnp.bfloat16)

    b2_p = jnp.zeros((1, OUT_STORE), jnp.float32)
    b2_p = b2_p.at[0, :NUM_ACTION].set(jnp.asarray(b2, jnp.float32))

    return w1t_p, b1_p, w2t_p, b2_p


def _select_tiling(B, tile_b):
    """Balanced batch tiles.

    Avoids the near-whole-tile remainder waste of round_up(B, tile_b) and
    keeps >=2 grid steps when B allows, so ("parallel",) can shard the batch
    across both v7x TensorCores (no-op on v5e/v6e).
    """
    n_tiles = max(_cdiv(B, tile_b), min(2, _cdiv(B, 8)))
    tb = _round_up(_cdiv(B, n_tiles), 8)
    b_pad = _round_up(B, tb)
    return tb, b_pad


def net_forward(x, prepared_params, *, tile_b=DEFAULT_TILE_B):
    """Forward pass of Net.

    x: [B, NUM_STATE] float32
    prepared_params: output of prepare_params()
    returns action_prob (logits): [B, NUM_ACTION] float32
    """
    w1t_p, b1_p, w2t_p, b2_p = prepared_params
    B = x.shape[0]

    tb, b_pad = _select_tiling(B, tile_b)

    x_p = jnp.asarray(x, jnp.float32)
    if b_pad != B:
        x_p = jnp.pad(x_p, ((0, b_pad - B), (0, 0)))

    grid = (b_pad // tb,)

    out = pl.pallas_call(
        _net_kernel,
        out_shape=jax.ShapeDtypeStruct((b_pad, OUT_STORE), jnp.float32),
        grid_spec=pltpu.PrefetchScalarGridSpec(
            num_scalar_prefetch=0,
            grid=grid,
            in_specs=[
                # x: batch-tiled, double-buffered by the Pallas pipeline.
                pl.BlockSpec((tb, NUM_STATE), lambda i: (i, 0)),
                # Weights / biases: constant index_map -> VMEM-resident.
                pl.BlockSpec((NUM_STATE, H_PAD), lambda i: (0, 0)),
                pl.BlockSpec((1, H_PAD), lambda i: (0, 0)),
                pl.BlockSpec((H_PAD, OUT_PAD), lambda i: (0, 0)),
                pl.BlockSpec((1, OUT_STORE), lambda i: (0, 0)),
            ],
            out_specs=pl.BlockSpec((tb, OUT_STORE), lambda i: (i, 0)),
        ),
        compiler_params=pltpu.CompilerParams(
            dimension_semantics=("parallel",),  # batch axis -> 2 TCs on v7x
        ),
    )(x_p, w1t_p, b1_p, w2t_p, b2_p)

    return out[:B, :NUM_ACTION]


def init_params(key):
    """Deterministic init mimicking PyTorch's default Linear init:
    U(-1/sqrt(fan_in), 1/sqrt(fan_in))."""
    k1, k2, k3, k4 = jax.random.split(key, 4)
    bound1 = 1.0 / jnp.sqrt(jnp.float32(NUM_STATE))
    bound2 = 1.0 / jnp.sqrt(jnp.float32(HIDDEN))
    w1 = jax.random.uniform(k1, (HIDDEN, NUM_STATE), jnp.float32, -bound1, bound1)
    b1 = jax.random.uniform(k2, (HIDDEN,), jnp.float32, -bound1, bound1)
    w2 = jax.random.uniform(k3, (NUM_ACTION, HIDDEN), jnp.float32, -bound2, bound2)
    b2 = jax.random.uniform(k4, (NUM_ACTION,), jnp.float32, -bound2, bound2)
    return w1, b1, w2, b2


if __name__ == "__main__":
    key = jax.random.PRNGKey(0)
    kx, kx2, kp = jax.random.split(key, 3)

    w1, b1, w2, b2 = init_params(kp)
    params = prepare_params(w1, b1, w2, b2)   # hoisted out of the call path

    def ref_fn(xv):
        return jnp.maximum(xv @ w1.T + b1, 0.0) @ w2.T + b2

    # fc2 now runs with bf16 operands on the MXU -> relaxed tolerance.
    ATOL = 2e-2
    RTOL = 2e-2

    # Small-batch check (single grid step, e.g. action selection in the DQN loop).
    B = 8
    x = jax.random.normal(kx, (B, NUM_STATE), jnp.float32)
    out = net_forward(x, params)
    jax.block_until_ready(out)
    assert out.shape == (B, NUM_ACTION)
    assert jnp.allclose(out, ref_fn(x), atol=ATOL, rtol=RTOL)

    # Multi-tile check (exercises balanced tiling, batch padding, >=2 grid steps).
    B2 = 1000
    x2 = jax.random.normal(kx2, (B2, NUM_STATE), jnp.float32)
    out2 = net_forward(x2, params)
    jax.block_until_ready(out2)
    assert out2.shape == (B2, NUM_ACTION)
    assert jnp.allclose(out2, ref_fn(x2), atol=ATOL, rtol=RTOL)

    print("KERNEL_OK")
</pallas_src>

<mosaic_0001>
module attributes {stable_mosaic.version = 11 : i64} {
  func.func @_net_kernel(%arg0: i32, %arg1: memref<8x2xf32, #tpu.memory_space<vmem>>, %arg2: memref<2x128xf32, #tpu.memory_space<vmem>>, %arg3: memref<1x128xf32, #tpu.memory_space<vmem>>, %arg4: memref<128x128xbf16, #tpu.memory_space<vmem>>, %arg5: memref<1x8xf32, #tpu.memory_space<vmem>>, %arg6: memref<8x8xf32, #tpu.memory_space<vmem>>) attributes {dimension_semantics = [#tpu.dimension_semantics<parallel>], iteration_bounds = array<i64: 1>, scalar_prefetch = 0 : i64, scratch_operands = 0 : i64, tpu.core_type = #tpu.core_type<tc>, window_params = [{transform_indices = @transform_0, window_bounds = array<i64: 8, 2>}, {pipeline_mode = #tpu.pipeline_mode<synchronous>, transform_indices = @transform_1, window_bounds = array<i64: 2, 128>}, {pipeline_mode = #tpu.pipeline_mode<synchronous>, transform_indices = @transform_2, window_bounds = array<i64: 1, 128>}, {pipeline_mode = #tpu.pipeline_mode<synchronous>, transform_indices = @transform_3, window_bounds = array<i64: 128, 128>}, {pipeline_mode = #tpu.pipeline_mode<synchronous>, transform_indices = @transform_4, window_bounds = array<i64: 1, 8>}, {transform_indices = @transform_5, window_bounds = array<i64: 8, 8>}]} {
    %c0 = arith.constant 0 : index
    %c0_0 = arith.constant 0 : index
    %0 = vector.load %arg1[%c0, %c0_0] : memref<8x2xf32, #tpu.memory_space<vmem>>, vector<8x2xf32>
    %c0_1 = arith.constant 0 : index
    %c0_2 = arith.constant 0 : index
    %1 = vector.load %arg2[%c0_1, %c0_2] : memref<2x128xf32, #tpu.memory_space<vmem>>, vector<2x128xf32>
    %2 = vector.extract_strided_slice %0 {offsets = [0, 0], sizes = [8, 1], strides = [1, 1]} : vector<8x2xf32> to vector<8x1xf32>
    %3 = vector.extract_strided_slice %1 {offsets = [0, 0], sizes = [1, 128], strides = [1, 1]} : vector<2x128xf32> to vector<1x128xf32>
    %4 = vector.broadcast %2 : vector<8x1xf32> to vector<8x128xf32>
    %5 = vector.broadcast %3 : vector<1x128xf32> to vector<8x128xf32>
    %6 = arith.mulf %4, %5 : vector<8x128xf32>
    %7 = vector.extract_strided_slice %0 {offsets = [0, 1], sizes = [8, 1], strides = [1, 1]} : vector<8x2xf32> to vector<8x1xf32>
    %8 = vector.extract_strided_slice %1 {offsets = [1, 0], sizes = [1, 128], strides = [1, 1]} : vector<2x128xf32> to vector<1x128xf32>
    %9 = vector.broadcast %7 : vector<8x1xf32> to vector<8x128xf32>
    %10 = vector.broadcast %8 : vector<1x128xf32> to vector<8x128xf32>
    %11 = arith.mulf %9, %10 : vector<8x128xf32>
    %12 = arith.addf %6, %11 : vector<8x128xf32>
    %c0_3 = arith.constant 0 : index
    %c0_4 = arith.constant 0 : index
    %13 = vector.load %arg3[%c0_3, %c0_4] : memref<1x128xf32, #tpu.memory_space<vmem>>, vector<1x128xf32>
    %14 = vector.broadcast %13 : vector<1x128xf32> to vector<8x128xf32>
    %15 = arith.addf %12, %14 : vector<8x128xf32>
    %cst = arith.constant 0.000000e+00 : f32
    %16 = vector.broadcast %cst : f32 to vector<8x128xf32>
    %17 = arith.maximumf %15, %16 : vector<8x128xf32>
    %18 = arith.truncf %17 : vector<8x128xf32> to vector<8x128xbf16>
    %c0_5 = arith.constant 0 : index
    %c0_6 = arith.constant 0 : index
    %19 = vector.load %arg4[%c0_5, %c0_6] : memref<128x128xbf16, #tpu.memory_space<vmem>>, vector<128x128xbf16>
    %cst_7 = arith.constant dense<0.000000e+00> : vector<8x128xf32>
    %20 = tpu.matmul %18, %19, %cst_7 {dimension_numbers = #tpu.dot_dimension_numbers<[1], [0], [0], [1], [0, 0, 1, 1], [], []>} : vector<8x128xbf16>, vector<128x128xbf16>, vector<8x128xf32> -> vector<8x128xf32>
    %21 = vector.extract_strided_slice %20 {offsets = [0, 0], sizes = [8, 8], strides = [1, 1]} : vector<8x128xf32> to vector<8x8xf32>
    %c0_8 = arith.constant 0 : index
    %c0_9 = arith.constant 0 : index
    %22 = vector.load %arg5[%c0_8, %c0_9] : memref<1x8xf32, #tpu.memory_space<vmem>>, vector<1x8xf32>
    %23 = vector.broadcast %22 : vector<1x8xf32> to vector<8x8xf32>
    %24 = arith.addf %21, %23 : vector<8x8xf32>
    %c0_10 = arith.constant 0 : index
    %c0_11 = arith.constant 0 : index
    %25 = vector.load %arg6[%c0_10, %c0_11] : memref<8x8xf32, #tpu.memory_space<vmem>>, vector<8x8xf32>
    tpu.vector_store %arg6[%c0_10, %c0_11], %24 {strides = array<i32>} : memref<8x8xf32, #tpu.memory_space<vmem>>, vector<8x8xf32>,
    return
  }
  func.func @transform_0(%arg0: i32) -> (i32, i32) {
    %c0_i32 = arith.constant 0 : i32
    %c0_i32_0 = arith.constant 0 : i32
    return %arg0, %c0_i32 : i32, i32
  }
  func.func @transform_1(%arg0: i32) -> (i32, i32) {
    %c0_i32 = arith.constant 0 : i32
    %c0_i32_0 = arith.constant 0 : i32
    %c0_i32_1 = arith.constant 0 : i32
    return %c0_i32, %c0_i32_0 : i32, i32
  }
  func.func @transform_2(%arg0: i32) -> (i32, i32) {
    %c0_i32 = arith.constant 0 : i32
    %c0_i32_0 = arith.constant 0 : i32
    %c0_i32_1 = arith.constant 0 : i32
    return %c0_i32, %c0_i32_0 : i32, i32
  }
  func.func @transform_3(%arg0: i32) -> (i32, i32) {
    %c0_i32 = arith.constant 0 : i32
    %c0_i32_0 = arith.constant 0 : i32
    %c0_i32_1 = arith.constant 0 : i32
    return %c0_i32, %c0_i32_0 : i32, i32
  }
  func.func @transform_4(%arg0: i32) -> (i32, i32) {
    %c0_i32 = arith.constant 0 : i32
    %c0_i32_0 = arith.constant 0 : i32
    %c0_i32_1 = arith.constant 0 : i32
    return %c0_i32, %c0_i32_0 : i32, i32
  }
  func.func @transform_5(%arg0: i32) -> (i32, i32) {
    %c0_i32 = arith.constant 0 : i32
    %c0_i32_0 = arith.constant 0 : i32
    return %arg0, %c0_i32 : i32, i32
  }
}

</mosaic_0001>

<llo_original>
// kernel: tpu_custom_call.1
$region0: #{tpu_custom_call.1}
  #allocation0 [shape = 'u32[]', space=smem, size = 0x4, offset = 0x4, fixed_abs, tag = 'smem constant byte address 0x4 - core index']
  #allocation1 [shape = 'u32[144,128]{1,0:T(1,128)}', space=vmem, size = 0x12000, scoped, tag = 'internal scratch']
  %s0 = inlined_call_operand.vmem [shape: f32[8,2], index: 0, kind: input, shape index: {}]
  %s1 = inlined_call_operand.vmem [shape: f32[2,128], index: 1, kind: input, shape index: {}]
  %s2 = inlined_call_operand.vmem [shape: f32[1,128], index: 2, kind: input, shape index: {}]
  %s3 = inlined_call_operand.hbm [shape: bf16[128,128], index: 3, kind: input, shape index: {}]
  %s4 = inlined_call_operand.vmem [shape: f32[1,8], index: 4, kind: input, shape index: {}]
  %s5 = inlined_call_operand.hbm [shape: f32[8,8], index: 5, kind: output, shape index: {}]
  %s6 = sld [smem:[#allocation0]]
  $region34: #{tpu_custom_call.1} parent=0
    _
  %s8 = ssub.s32 1, %s6
  %s9 = scalar_select 0, %s8, %s6
  $region1: #{tpu_custom_call.1} parent=0
    #allocation2 [shape = 'u8[32768]{0}', space=vmem, size = 0x8000, scoped, tag = 'input window, operand 3, single buffered']
    #allocation3 [shape = 's32[1]{0}', space=sflag, size = 0x4, scoped, tag = 'scoped memory for tpu_custom_call.1']
    #allocation4 [shape = 's32[1]{0}', space=sflag, size = 0x4, scoped, tag = 'scoped memory for tpu_custom_call.1']
    #allocation5 [shape = 'u8[4096]{0}', space=vmem, size = 0x1000, scoped, tag = 'output window, operand 0, single buffered']
    %10 = vsyncpa [#allocation3], 0
    %11 = vsyncpa [#allocation4], 0
    // Predicated region
    $region2: #{tpu_custom_call.1} parent=1 // pred_check
      _
    $region3: #{tpu_custom_call.1} parent=1 // pred_check_branch
      %13 = sbr.rel (0) target = $region5
    $region4: #{tpu_custom_call.1} parent=1 // pred_region
      _
    $region5: #{tpu_custom_call.1} parent=1 // pred_fallthru
      _
    // Predicated region
    $region6: #{tpu_custom_call.1} parent=1 // pred_check
      _
    $region7: #{tpu_custom_call.1} parent=1 // pred_check_branch
      %15 = sbr.rel (0) target = $region9
    $region8: #{tpu_custom_call.1} parent=1 // pred_region
      _
    $region9: #{tpu_custom_call.1} parent=1 // pred_fallthru
      _
    // Predicated region
    $region10: #{tpu_custom_call.1} parent=1 // pred_check
      _
    $region11: #{tpu_custom_call.1} parent=1 // pred_check_branch
      %17 = sbr.rel (0) target = $region13
    $region12: #{tpu_custom_call.1} parent=1 // pred_region
      _
    $region13: #{tpu_custom_call.1} parent=1 // pred_fallthru
      _
    // Predicated region
    $region14: #{tpu_custom_call.1} parent=1 // pred_check
      _
    $region15: #{tpu_custom_call.1} parent=1 // pred_check_branch
      %19 = sbr.rel (0) target = $region17
    $region16: #{tpu_custom_call.1} parent=1 // pred_region
      %s21 = ssub.s32 1024, 1024
      %22 = vsyncadd [#allocation3], %s21
      %s23 = sshll.u32 [#allocation2], 4
      %s24 = int_to_ptr.vmem [resolvable:$true] %s23
      %29 = dma.hbm_to_vmem [thread:$0]  %s3, 1024, %s24, [#allocation3], 64, 64, 4
    $region17: #{tpu_custom_call.1} parent=1 // pred_fallthru
      _
    // Predicated region
    $region18: #{tpu_custom_call.1} parent=1 // pred_check
      _
    $region19: #{tpu_custom_call.1} parent=1 // pred_check_branch
      %31 = sbr.rel (0) target = $region21
    $region20: #{tpu_custom_call.1} parent=1 // pred_region
      _
    $region21: #{tpu_custom_call.1} parent=1 // pred_fallthru
      _
    // Predicated region
    $region22: #{tpu_custom_call.1} parent=1 // pred_check
      _
    $region23: #{tpu_custom_call.1} parent=1 // pred_check_branch
      %33 = sbr.rel (0) target = $region25
    $region24: #{tpu_custom_call.1} parent=1 // pred_region
      %34 = dma.done [#allocation3], 1024
    $region25: #{tpu_custom_call.1} parent=1 // pred_fallthru
      _
    %v36 = vld [vmem:[%s0] sm:$0xff]
    %v37 = vld [vmem:[%s1] sm:$0x3]
    %39 = vset.pattern.permute.xlu0 0
    %40 = vperm.xlu0 %39, %v36
    %v41 = vpop.permute.xlu0 %40
    %v43 = vlaneseq
    %v44 = vshrl.u32 %v43, 7
    %v45 = vsub.s32 0, %v44
    %v46 = vrot.slane %v37, %v45
    %v47 = vmul.f32 %v41, %v46
    %48 = vset.pattern.permute.xlu0 1
    %49 = vperm.xlu0 %48, %v36
    %v50 = vpop.permute.xlu0 %49
    %v52 = vlaneseq
    %v53 = vshrl.u32 %v52, 7
    %v54 = vsub.s32 1, %v53
    %v55 = vrot.slane %v37, %v54
    %v56 = vmul.f32 %v50, %v55
    %v57 = vadd.f32 %v47, %v56
    %v58 = vld [vmem:[%s2] sm:$0x1]
    %v60 = vlaneseq
    %v61 = vshrl.u32 %v60, 7
    %v62 = vsub.s32 0, %v61
    %v63 = vrot.slane %v58, %v62
    %v65 = vadd.f32 %v57, %v63
    %v66 = vmax.f32 %v65, 0.0
    %v67 = vpack.c.bf16 %v66, %v66
    %v68 = vld [vmem:[#allocation2] sm:$0xf]
    %v69 = vld [vmem:[#allocation2 + $0x4] sm:$0xf]
    %v70 = vld [vmem:[#allocation2 + $0x8] sm:$0xf]
    %v71 = vld [vmem:[#allocation2 + $0xc] sm:$0xf]
    %v72 = vld [vmem:[#allocation2 + $0x10] sm:$0xf]
    %v73 = vld [vmem:[#allocation2 + $0x14] sm:$0xf]
    %v74 = vld [vmem:[#allocation2 + $0x18] sm:$0xf]
    %v75 = vld [vmem:[#allocation2 + $0x1c] sm:$0xf]
    %v76 = vld [vmem:[#allocation2 + $0x20] sm:$0xf]
    %v77 = vld [vmem:[#allocation2 + $0x24] sm:$0xf]
    %v78 = vld [vmem:[#allocation2 + $0x28] sm:$0xf]
    %v79 = vld [vmem:[#allocation2 + $0x2c] sm:$0xf]
    %v80 = vld [vmem:[#allocation2 + $0x30] sm:$0xf]
    %v81 = vld [vmem:[#allocation2 + $0x34] sm:$0xf]
    %v82 = vld [vmem:[#allocation2 + $0x38] sm:$0xf]
    %v83 = vld [vmem:[#allocation2 + $0x3c] sm:$0xf]
    %v100 = vunpack.c.l.b16 %v68
    %v101 = vunpack.c.l.b16 %v69
    %v102 = vunpack.c.l.b16 %v70
    %v103 = vunpack.c.l.b16 %v71
    %v104 = vunpack.c.l.b16 %v72
    %v105 = vunpack.c.l.b16 %v73
    %v106 = vunpack.c.l.b16 %v74
    %v107 = vunpack.c.l.b16 %v75
    %v108 = vunpack.c.l.b16 %v76
    %v109 = vunpack.c.l.b16 %v77
    %v110 = vunpack.c.l.b16 %v78
    %v111 = vunpack.c.l.b16 %v79
    %v112 = vunpack.c.l.b16 %v80
    %v113 = vunpack.c.l.b16 %v81
    %v114 = vunpack.c.l.b16 %v82
    %v115 = vunpack.c.l.b16 %v83
    %v116 = vpack.c.b16 %v101, %v100
    %v117 = vpack.c.b16 %v103, %v102
    %v118 = vpack.c.b16 %v105, %v104
    %v119 = vpack.c.b16 %v107, %v106
    %v120 = vpack.c.b16 %v109, %v108
    %v121 = vpack.c.b16 %v111, %v110
    %v122 = vpack.c.b16 %v113, %v112
    %v123 = vpack.c.b16 %v115, %v114
    %132 = vmatprep.subr.bf16.mxu0 0
    %133 = vmatpush1.bf16.msra.mxu0 %v116
    %134 = vmatprep.subr.bf16.mxu0 0
    %135 = vmatpush1.bf16.msra.mxu0 %v117
    %136 = vmatprep.subr.bf16.mxu0 0
    %137 = vmatpush1.bf16.msra.mxu0 %v118
    %138 = vmatprep.subr.bf16.mxu0 0
    %139 = vmatpush1.bf16.msra.mxu0 %v119
    %140 = vmatprep.subr.bf16.mxu0 0
    %141 = vmatpush1.bf16.msra.mxu0 %v120
    %142 = vmatprep.subr.bf16.mxu0 0
    %143 = vmatpush1.bf16.msra.mxu0 %v121
    %144 = vmatprep.subr.bf16.mxu0 0
    %145 = vmatpush1.bf16.msra.mxu0 %v122
    %146 = vmatprep.subr.bf16.mxu0 0
    %147 = vmatpush1.bf16.msra.mxu0 %v123
    %148 = vmatprep.subr.bf16.mxu0 0
    %149 = vmatpush1.bf16.msra.mxu0 0
    %150 = vmatprep.subr.bf16.mxu0 0
    %151 = vmatpush1.bf16.msra.mxu0 0
    %152 = vmatprep.subr.bf16.mxu0 0
    %153 = vmatpush1.bf16.msra.mxu0 0
    %154 = vmatprep.subr.bf16.mxu0 0
    %155 = vmatpush1.bf16.msra.mxu0 0
    %156 = vmatprep.subr.bf16.mxu0 0
    %157 = vmatpush1.bf16.msra.mxu0 0
    %158 = vmatprep.subr.bf16.mxu0 0
    %159 = vmatpush1.bf16.msra.mxu0 0
    %160 = vmatprep.subr.bf16.mxu0 0
    %161 = vmatpush1.bf16.msra.mxu0 0
    %162 = vmatprep.subr.bf16.mxu0 0
    %163 = vmatpush1.bf16.msra.mxu0 0
    %164 = vmatprep.mubr.bf16.mxu0 0
    %165 = vmatmul.mubr.bf16.gmra.mrb[0].mxu0 %v67
    %v166 = vpop.f32.mrb[0].mxu0
    %v167 = vadd.f32 0.0, %v166
    %v168 = vpop.f32.mrb[0].mxu0
    %v169 = vpop.f32.mrb[0].mxu0
    %v170 = vpop.f32.mrb[0].mxu0
    %171 = vdwg.mxu0
    %v172 = vld [vmem:[%s4] sm:$0x1]
    %v174 = vlaneseq
    %v175 = vshrl.u32 %v174, 7
    %v176 = vsub.s32 0, %v175
    %v177 = vrot.slane %v172, %v176
    %v179 = vadd.f32 %v167, %v177
    %vm180 = vcmask 64512
    %181 = vst.msk [vmem:[#allocation5] sm:$0xff] %vm180, %v179
    // Predicated region
    $region26: #{tpu_custom_call.1} parent=1 // pred_check
      _
    $region27: #{tpu_custom_call.1} parent=1 // pred_check_branch
      %183 = sbr.rel (0) target = $region29
    $region28: #{tpu_custom_call.1} parent=1 // pred_region
      %s185 = ssub.s32 128, 128
      %186 = vsyncadd [#allocation4], %s185
      %s188 = sshll.u32 [#allocation5], 4
      %s189 = int_to_ptr.vmem [resolvable:$true] %s188
      %191 = dma.vmem_to_hbm [thread:$0]  %s189, 128, %s5, [#allocation4]
    $region29: #{tpu_custom_call.1} parent=1 // pred_fallthru
      _
    // Predicated region
    $region30: #{tpu_custom_call.1} parent=1 // pred_check
      _
    $region31: #{tpu_custom_call.1} parent=1 // pred_check_branch
      %193 = sbr.rel (0) target = $region33
    $region32: #{tpu_custom_call.1} parent=1 // pred_region
      %194 = dma.done [#allocation4], 128
    $region33: #{tpu_custom_call.1} parent=1 // pred_fallthru
      _
    %195 = vsyncpa [#allocation3], 1
    %196 = vsyncpa [#allocation4], 1

</llo_original>
